<compile_context>
chip_gen: v5e
topology: v5e:2x2
jax: 0.10.0
libtpu: 0.0.40
codegen_flags: <defaults>
</compile_context>

<pallas_src>
import numpy as np
import jax
import jax.numpy as jnp
from jax import lax
from jax.experimental import pallas as pl
from jax.experimental.pallas import tpu as pltpu


# --------------------------------------------------------------------------
# Filter-matrix construction (host-side, tiny)
# --------------------------------------------------------------------------
def _norm_kernel_1d(k):
    """1D kernel `k` -> normalized separable factor (make_kernel does
    outer(k,k)/sum(outer(k,k)) == outer(k/sum(k), k/sum(k)))."""
    k = np.asarray(k, dtype=np.float32)
    assert k.ndim == 1, "separable (1D) blur kernel expected"
    return k / k.sum()


def _downsample_matrix(n_in, k1_flipped, factor, pad0, pad1):
    """Dense (n_out, n_in) matrix for 1D zero-pad + correlate(flipped k) +
    stride-`factor` downsample.  out[o] = sum_h D[o, h] * x[h]."""
    kh = k1_flipped.shape[0]
    n_out = (n_in + pad0 + pad1 - kh) // factor + 1
    D = np.zeros((n_out, n_in), dtype=np.float32)
    for o in range(n_out):
        for i in range(kh):
            h = o * factor + i - pad0
            if 0 <= h < n_in:
                D[o, h] += k1_flipped[i]
    return D


def _pick_channel_tile(bc, h, w, hout, wout, vmem_budget=8 << 20):
    """Largest divisor of bc whose per-step VMEM footprint fits the budget."""
    # f32 footprint per channel: x block (double-buffered) + horizontal-pass
    # intermediate + output block (double-buffered) + broadcast Dh slab.
    per_chan = 4 * (2 * h * w + h * wout + 2 * hout * wout + hout * h)
    max_ct = max(1, vmem_budget // max(per_chan, 1))
    ct = 1
    for d in range(1, bc + 1):
        if bc % d == 0 and d <= max_ct:
            ct = d
    return ct


# --------------------------------------------------------------------------
# Pallas kernel: per channel-tile  out = Dh @ x @ Dw^T  (two MXU passes)
# --------------------------------------------------------------------------
def _make_downsample_kernel(ct, hout, h):
    def kernel(x_ref, dh_ref, dwt_ref, o_ref):
        # x_ref:   (CT, H, W)        channel tile of images
        # dh_ref:  (Hout, H)         vertical pad+filter+downsample matrix
        # dwt_ref: (W, Wout)         horizontal matrix, pre-transposed
        # o_ref:   (CT, Hout, Wout)
        x = x_ref[...].astype(jnp.float32)                       # (CT, H, W)

        # Horizontal pass: contract the lane axis W in one big matmul.
        tmp = lax.dot_general(
            x, dwt_ref[...],
            dimension_numbers=(((2,), (0,)), ((), ())),
            preferred_element_type=jnp.float32)                  # (CT, H, Wout)

        # Vertical pass: batched matmul over the channel tile.  Broadcast of
        # Dh is hoisted once per grid step (cheap, sized by the VMEM budget).
        dh_b = jnp.broadcast_to(dh_ref[...], (ct, hout, h))      # (CT, Hout, H)
        out = lax.dot_general(
            dh_b, tmp,
            dimension_numbers=(((2,), (1,)), ((0,), (0,))),
            preferred_element_type=jnp.float32)                  # (CT, Hout, Wout)

        o_ref[...] = out.astype(o_ref.dtype)

    return kernel


def downsample_pallas(x, kernel=(1.0, 3.0, 3.0, 1.0), factor=2):
    """JAX/Pallas equivalent of Downsample(kernel, factor).forward(x), NCHW."""
    B, C, H, W = x.shape
    k1 = _norm_kernel_1d(kernel)
    k1_flipped = k1[::-1].copy()          # upfirdn2d correlates with flip(k2d)
    kh = k1.shape[0]
    p = kh - factor
    pad0 = (p + 1) // 2
    pad1 = p // 2

    Dh = _downsample_matrix(H, k1_flipped, factor, pad0, pad1)   # (Hout, H)
    Dw = _downsample_matrix(W, k1_flipped, factor, pad0, pad1)   # (Wout, W)
    Hout, Wout = Dh.shape[0], Dw.shape[0]

    BC = B * C
    CT = _pick_channel_tile(BC, H, W, Hout, Wout)

    x_flat = x.reshape(BC, H, W)
    dh = jnp.asarray(Dh)                                         # (Hout, H)
    dwt = jnp.asarray(Dw.T)                                      # (W, Wout)

    out = pl.pallas_call(
        _make_downsample_kernel(CT, Hout, H),
        out_shape=jax.ShapeDtypeStruct((BC, Hout, Wout), x.dtype),
        grid_spec=pltpu.PrefetchScalarGridSpec(
            num_scalar_prefetch=0,
            grid=(BC // CT,),
            in_specs=[
                pl.BlockSpec((CT, H, W), lambda i: (i, 0, 0)),   # x tile
                pl.BlockSpec((Hout, H), lambda i: (0, 0)),       # Dh (resident)
                pl.BlockSpec((W, Wout), lambda i: (0, 0)),       # Dw^T (resident)
            ],
            out_specs=pl.BlockSpec((CT, Hout, Wout), lambda i: (i, 0, 0)),
        ),
        compiler_params=pltpu.CompilerParams(
            dimension_semantics=("parallel",)),
    )(x_flat, dh, dwt)

    return out.reshape(B, C, Hout, Wout)


# --------------------------------------------------------------------------
# Pure-JAX reference (mirrors the PyTorch upfirdn2d math) for verification
# --------------------------------------------------------------------------
def _upfirdn2d_ref(x, kernel2d, up=1, down=1, pad=(0, 0)):
    if len(pad) == 2:
        pad = (pad[0], pad[1], pad[0], pad[1])
    px0, px1, py0, py1 = pad
    B, C, H, W = x.shape
    kh, kw = kernel2d.shape
    x = x.reshape(B * C, 1, H, W)
    w = jnp.flip(kernel2d, (0, 1)).reshape(1, 1, kh, kw).astype(x.dtype)
    out = jax.lax.conv_general_dilated(
        x, w,
        window_strides=(down, down),
        padding=((py0, py1 + up - 1), (px0, px1 + up - 1)),
        lhs_dilation=(up, up),
        dimension_numbers=("NCHW", "OIHW", "NCHW"),
    )
    out_h = (H * up + py0 + py1 - kh) // down + 1
    out_w = (W * up + px0 + px1 - kw) // down + 1
    return out.reshape(B, C, out_h, out_w)


def downsample_reference(x, kernel=(1.0, 3.0, 3.0, 1.0), factor=2):
    k = np.asarray(kernel, dtype=np.float32)
    k2d = np.outer(k, k)
    k2d = k2d / k2d.sum()
    p = k2d.shape[0] - factor
    pad0 = (p + 1) // 2
    pad1 = p // 2
    return _upfirdn2d_ref(x, jnp.asarray(k2d), up=1, down=factor,
                          pad=(pad0, pad1))


if __name__ == "__main__":
    B, C, H, W = 2, 4, 16, 16
    factor = 2
    blur_kernel = (1.0, 3.0, 3.0, 1.0)

    key = jax.random.PRNGKey(0)
    x = jax.random.normal(key, (B, C, H, W), jnp.float32)

    out = downsample_pallas(x, blur_kernel, factor)
    out = jax.block_until_ready(out)

    ref = downsample_reference(x, blur_kernel, factor)
    ref = jax.block_until_ready(ref)

    assert out.shape == (B, C, H // factor, W // factor), out.shape
    assert jnp.allclose(out, ref, atol=1e-4, rtol=1e-4), (
        float(jnp.max(jnp.abs(out - ref))))
    print("KERNEL_OK")
</pallas_src>

<mosaic_0001>
module attributes {stable_mosaic.version = 11 : i64} {
  func.func @kernel(%arg0: i32, %arg1: memref<8x16x16xf32, #tpu.memory_space<vmem>>, %arg2: memref<8x16xf32, #tpu.memory_space<vmem>>, %arg3: memref<16x8xf32, #tpu.memory_space<vmem>>, %arg4: memref<8x8x8xf32, #tpu.memory_space<vmem>>) attributes {dimension_semantics = [#tpu.dimension_semantics<parallel>], iteration_bounds = array<i64: 1>, scalar_prefetch = 0 : i64, scratch_operands = 0 : i64, tpu.core_type = #tpu.core_type<tc>, window_params = [{transform_indices = @transform_0, window_bounds = array<i64: 8, 16, 16>}, {pipeline_mode = #tpu.pipeline_mode<synchronous>, transform_indices = @transform_1, window_bounds = array<i64: 8, 16>}, {pipeline_mode = #tpu.pipeline_mode<synchronous>, transform_indices = @transform_2, window_bounds = array<i64: 16, 8>}, {transform_indices = @transform_3, window_bounds = array<i64: 8, 8, 8>}]} {
    %c0 = arith.constant 0 : index
    %c0_0 = arith.constant 0 : index
    %c0_1 = arith.constant 0 : index
    %0 = vector.load %arg1[%c0, %c0_0, %c0_1] : memref<8x16x16xf32, #tpu.memory_space<vmem>>, vector<8x16x16xf32>
    %c0_2 = arith.constant 0 : index
    %c0_3 = arith.constant 0 : index
    %1 = vector.load %arg3[%c0_2, %c0_3] : memref<16x8xf32, #tpu.memory_space<vmem>>, vector<16x8xf32>
    %cst = arith.constant dense<0.000000e+00> : vector<8x16x8xf32>
    %2 = tpu.matmul %0, %1, %cst {dimension_numbers = #tpu.dot_dimension_numbers<[2], [0], [0, 1], [1], [0, 0, 0, 1, 1, 1], [], []>} : vector<8x16x16xf32>, vector<16x8xf32>, vector<8x16x8xf32> -> vector<8x16x8xf32>
    %c0_4 = arith.constant 0 : index
    %c0_5 = arith.constant 0 : index
    %3 = vector.load %arg2[%c0_4, %c0_5] : memref<8x16xf32, #tpu.memory_space<vmem>>, vector<8x16xf32>
    %4 = vector.shape_cast %3 : vector<8x16xf32> to vector<1x8x16xf32>
    %5 = vector.broadcast %4 : vector<1x8x16xf32> to vector<8x8x16xf32>
    %cst_6 = arith.constant dense<0.000000e+00> : vector<8x8x8xf32>
    %6 = tpu.matmul %5, %2, %cst_6 {dimension_numbers = #tpu.dot_dimension_numbers<[2], [1], [1], [2], [0, 0, 0, 1, 1, 2], [0], [0]>} : vector<8x8x16xf32>, vector<8x16x8xf32>, vector<8x8x8xf32> -> vector<8x8x8xf32>
    %c0_7 = arith.constant 0 : index
    %c0_8 = arith.constant 0 : index
    %c0_9 = arith.constant 0 : index
    %7 = vector.load %arg4[%c0_7, %c0_8, %c0_9] : memref<8x8x8xf32, #tpu.memory_space<vmem>>, vector<8x8x8xf32>
    tpu.vector_store %arg4[%c0_7, %c0_8, %c0_9], %6 {strides = array<i32>} : memref<8x8x8xf32, #tpu.memory_space<vmem>>, vector<8x8x8xf32>,
    return
  }
  func.func @transform_0(%arg0: i32) -> (i32, i32, i32) {
    %c0_i32 = arith.constant 0 : i32
    %c0_i32_0 = arith.constant 0 : i32
    %c0_i32_1 = arith.constant 0 : i32
    return %arg0, %c0_i32, %c0_i32_0 : i32, i32, i32
  }
  func.func @transform_1(%arg0: i32) -> (i32, i32) {
    %c0_i32 = arith.constant 0 : i32
    %c0_i32_0 = arith.constant 0 : i32
    %c0_i32_1 = arith.constant 0 : i32
    return %c0_i32, %c0_i32_0 : i32, i32
  }
  func.func @transform_2(%arg0: i32) -> (i32, i32) {
    %c0_i32 = arith.constant 0 : i32
    %c0_i32_0 = arith.constant 0 : i32
    %c0_i32_1 = arith.constant 0 : i32
    return %c0_i32, %c0_i32_0 : i32, i32
  }
  func.func @transform_3(%arg0: i32) -> (i32, i32, i32) {
    %c0_i32 = arith.constant 0 : i32
    %c0_i32_0 = arith.constant 0 : i32
    %c0_i32_1 = arith.constant 0 : i32
    return %arg0, %c0_i32, %c0_i32_0 : i32, i32, i32
  }
}

</mosaic_0001>

<llo_original>
// kernel: tpu_custom_call.1
$region0: #{tpu_custom_call.1}
  #allocation0 [shape = 'u32[]', space=smem, size = 0x4, offset = 0x4, fixed_abs, tag = 'smem constant byte address 0x4 - core index']
  #allocation1 [shape = 'u32[72,128]{1,0:T(1,128)}', space=vmem, size = 0x9000, scoped, tag = 'internal scratch']
  %s0 = inlined_call_operand.hbm [shape: f32[8,16,16], index: 0, kind: input, shape index: {}]
  %s1 = inlined_call_operand.vmem [shape: f32[8,16], index: 1, kind: input, shape index: {}]
  %s2 = inlined_call_operand.vmem [shape: f32[16,8], index: 2, kind: input, shape index: {}]
  %s3 = inlined_call_operand.hbm [shape: f32[8,8,8], index: 3, kind: output, shape index: {}]
  %s4 = sld [smem:[#allocation0]]
  $region26: #{tpu_custom_call.1} parent=0
    _
  %s6 = ssub.s32 1, %s4
  %s7 = scalar_select 0, %s6, %s4
  $region1: #{tpu_custom_call.1} parent=0
    #allocation2 [shape = 'u8[65536]{0}', space=vmem, size = 0x10000, scoped, tag = 'input window, operand 0, single buffered']
    #allocation3 [shape = 's32[1]{0}', space=sflag, size = 0x4, scoped, tag = 'scoped memory for tpu_custom_call.1']
    #allocation4 [shape = 's32[1]{0}', space=sflag, size = 0x4, scoped, tag = 'scoped memory for tpu_custom_call.1']
    #allocation5 [shape = 'u8[32768]{0}', space=vmem, size = 0x8000, scoped, tag = 'output window, operand 0, single buffered']
    %8 = vsyncpa [#allocation3], 0
    %9 = vsyncpa [#allocation4], 0
    // Predicated region
    $region2: #{tpu_custom_call.1} parent=1 // pred_check
      _
    $region3: #{tpu_custom_call.1} parent=1 // pred_check_branch
      %11 = sbr.rel (0) target = $region5
    $region4: #{tpu_custom_call.1} parent=1 // pred_region
      %13 = vsyncadd [#allocation3], 0
      %s14 = sshll.u32 %s0, 4
      %s15 = int_to_ptr.hbm [resolvable:$true] %s14
      %s16 = sshll.u32 [#allocation2], 4
      %s17 = int_to_ptr.vmem [resolvable:$true] %s16
      %22 = dma.hbm_to_vmem [thread:$0]  %s15, 2048, %s17, [#allocation3], 128, 128, 8
    $region5: #{tpu_custom_call.1} parent=1 // pred_fallthru
      _
    // Predicated region
    $region6: #{tpu_custom_call.1} parent=1 // pred_check
      _
    $region7: #{tpu_custom_call.1} parent=1 // pred_check_branch
      %24 = sbr.rel (0) target = $region9
    $region8: #{tpu_custom_call.1} parent=1 // pred_region
      _
    $region9: #{tpu_custom_call.1} parent=1 // pred_fallthru
      _
    // Predicated region
    $region10: #{tpu_custom_call.1} parent=1 // pred_check
      _
    $region11: #{tpu_custom_call.1} parent=1 // pred_check_branch
      %26 = sbr.rel (0) target = $region13
    $region12: #{tpu_custom_call.1} parent=1 // pred_region
      _
    $region13: #{tpu_custom_call.1} parent=1 // pred_fallthru
      _
    // Predicated region
    $region14: #{tpu_custom_call.1} parent=1 // pred_check
      _
    $region15: #{tpu_custom_call.1} parent=1 // pred_check_branch
      %28 = sbr.rel (0) target = $region17
    $region16: #{tpu_custom_call.1} parent=1 // pred_region
      %30 = dma.done [#allocation3], 2048
    $region17: #{tpu_custom_call.1} parent=1 // pred_fallthru
      _
    %v31 = vld [vmem:[#allocation2] sm:$0xff]
    %v32 = vld [vmem:[#allocation2 + $0x8] sm:$0xff]
    %v33 = vld [vmem:[#allocation2 + $0x10] sm:$0xff]
    %v34 = vld [vmem:[#allocation2 + $0x18] sm:$0xff]
    %v35 = vld [vmem:[#allocation2 + $0x20] sm:$0xff]
    %v36 = vld [vmem:[#allocation2 + $0x28] sm:$0xff]
    %v37 = vld [vmem:[#allocation2 + $0x30] sm:$0xff]
    %v38 = vld [vmem:[#allocation2 + $0x38] sm:$0xff]
    %v39 = vld [vmem:[#allocation2 + $0x40] sm:$0xff]
    %v40 = vld [vmem:[#allocation2 + $0x48] sm:$0xff]
    %v41 = vld [vmem:[#allocation2 + $0x50] sm:$0xff]
    %v42 = vld [vmem:[#allocation2 + $0x58] sm:$0xff]
    %v43 = vld [vmem:[#allocation2 + $0x60] sm:$0xff]
    %v44 = vld [vmem:[#allocation2 + $0x68] sm:$0xff]
    %v45 = vld [vmem:[#allocation2 + $0x70] sm:$0xff]
    %v46 = vld [vmem:[#allocation2 + $0x78] sm:$0xff]
    %v47 = vld [vmem:[%s2] sm:$0xff]
    %v48 = vld [vmem:[%s2 + $0x8] sm:$0xff]
    %vm49 = vcmask 130048
    %v51 = vsel %vm49, %v31, 0
    %v54 = vsel %vm49, %v32, 0
    %v57 = vsel %vm49, %v33, 0
    %v60 = vsel %vm49, %v34, 0
    %v63 = vsel %vm49, %v35, 0
    %v66 = vsel %vm49, %v36, 0
    %v69 = vsel %vm49, %v37, 0
    %v72 = vsel %vm49, %v38, 0
    %v75 = vsel %vm49, %v39, 0
    %v78 = vsel %vm49, %v40, 0
    %v81 = vsel %vm49, %v41, 0
    %v84 = vsel %vm49, %v42, 0
    %v87 = vsel %vm49, %v43, 0
    %v90 = vsel %vm49, %v44, 0
    %v93 = vsel %vm49, %v45, 0
    %v96 = vsel %vm49, %v46, 0
    %98 = vmatpush.msra.mxu0 0.0
    %99 = vmatpush.msra.mxu0 0.0
    %100 = vmatpush.msra.mxu0 0.0
    %101 = vmatpush.msra.mxu0 0.0
    %102 = vmatpush.msra.mxu0 0.0
    %103 = vmatpush.msra.mxu0 0.0
    %104 = vmatpush.msra.mxu0 0.0
    %105 = vmatpush.msra.mxu0 0.0
    %106 = vmatpush.msra.mxu0 0.0
    %107 = vmatpush.msra.mxu0 0.0
    %108 = vmatpush.msra.mxu0 0.0
    %109 = vmatpush.msra.mxu0 0.0
    %110 = vmatpush.msra.mxu0 0.0
    %111 = vmatpush.msra.mxu0 0.0
    %112 = vmatpush.msra.mxu0 %v48
    %113 = vmatpush.msra.mxu0 %v47
    %114 = vmatmul.f32.gmra.mxu0 %v51
    %v115 = vpop.f32.mrf.mxu0
    %v116 = vadd.f32 0.0, %v115
    %117 = vmatmul.f32.gmra.mxu0 %v54
    %v118 = vpop.f32.mrf.mxu0
    %v119 = vadd.f32 0.0, %v118
    %120 = vmatmul.f32.gmra.mxu0 %v57
    %v121 = vpop.f32.mrf.mxu0
    %v122 = vadd.f32 0.0, %v121
    %123 = vmatmul.f32.gmra.mxu0 %v60
    %v124 = vpop.f32.mrf.mxu0
    %v125 = vadd.f32 0.0, %v124
    %126 = vmatmul.f32.gmra.mxu0 %v63
    %v127 = vpop.f32.mrf.mxu0
    %v128 = vadd.f32 0.0, %v127
    %129 = vmatmul.f32.gmra.mxu0 %v66
    %v130 = vpop.f32.mrf.mxu0
    %v131 = vadd.f32 0.0, %v130
    %132 = vmatmul.f32.gmra.mxu0 %v69
    %v133 = vpop.f32.mrf.mxu0
    %v134 = vadd.f32 0.0, %v133
    %135 = vmatmul.f32.gmra.mxu0 %v72
    %v136 = vpop.f32.mrf.mxu0
    %v137 = vadd.f32 0.0, %v136
    %138 = vmatmul.f32.gmra.mxu0 %v75
    %v139 = vpop.f32.mrf.mxu0
    %v140 = vadd.f32 0.0, %v139
    %141 = vmatmul.f32.gmra.mxu0 %v78
    %v142 = vpop.f32.mrf.mxu0
    %v143 = vadd.f32 0.0, %v142
    %144 = vmatmul.f32.gmra.mxu0 %v81
    %v145 = vpop.f32.mrf.mxu0
    %v146 = vadd.f32 0.0, %v145
    %147 = vmatmul.f32.gmra.mxu0 %v84
    %v148 = vpop.f32.mrf.mxu0
    %v149 = vadd.f32 0.0, %v148
    %150 = vmatmul.f32.gmra.mxu0 %v87
    %v151 = vpop.f32.mrf.mxu0
    %v152 = vadd.f32 0.0, %v151
    %153 = vmatmul.f32.gmra.mxu0 %v90
    %v154 = vpop.f32.mrf.mxu0
    %v155 = vadd.f32 0.0, %v154
    %156 = vmatmul.f32.gmra.mxu0 %v93
    %v157 = vpop.f32.mrf.mxu0
    %v158 = vadd.f32 0.0, %v157
    %159 = vmatmul.f32.gmra.mxu0 %v96
    %v160 = vpop.f32.mrf.mxu0
    %v161 = vadd.f32 0.0, %v160
    %162 = vdwg.mxu0
    %v163 = vld [vmem:[%s1] sm:$0xff]
    %v165 = vsel %vm49, %v163, 0
    %167 = vmatpush.msra.mxu0 0.0
    %168 = vmatpush.msra.mxu0 0.0
    %169 = vmatpush.msra.mxu0 0.0
    %170 = vmatpush.msra.mxu0 0.0
    %171 = vmatpush.msra.mxu0 0.0
    %172 = vmatpush.msra.mxu0 0.0
    %173 = vmatpush.msra.mxu0 0.0
    %174 = vmatpush.msra.mxu0 0.0
    %175 = vmatpush.msra.mxu0 0.0
    %176 = vmatpush.msra.mxu0 0.0
    %177 = vmatpush.msra.mxu0 0.0
    %178 = vmatpush.msra.mxu0 0.0
    %179 = vmatpush.msra.mxu0 0.0
    %180 = vmatpush.msra.mxu0 0.0
    %181 = vmatpush.msra.mxu0 %v119
    %182 = vmatpush.msra.mxu0 %v116
    %183 = vmatmul.f32.gmra.mxu0 %v165
    %v184 = vpop.f32.mrf.mxu0
    %v185 = vadd.f32 0.0, %v184
    %186 = vdwg.mxu0
    %187 = vmatpush.msra.mxu0 0.0
    %188 = vmatpush.msra.mxu0 0.0
    %189 = vmatpush.msra.mxu0 0.0
    %190 = vmatpush.msra.mxu0 0.0
    %191 = vmatpush.msra.mxu0 0.0
    %192 = vmatpush.msra.mxu0 0.0
    %193 = vmatpush.msra.mxu0 0.0
    %194 = vmatpush.msra.mxu0 0.0
    %195 = vmatpush.msra.mxu0 0.0
    %196 = vmatpush.msra.mxu0 0.0
    %197 = vmatpush.msra.mxu0 0.0
    %198 = vmatpush.msra.mxu0 0.0
    %199 = vmatpush.msra.mxu0 0.0
    %200 = vmatpush.msra.mxu0 0.0
    %201 = vmatpush.msra.mxu0 %v125
    %202 = vmatpush.msra.mxu0 %v122
    %203 = vmatmul.f32.gmra.mxu0 %v165
    %v204 = vpop.f32.mrf.mxu0
    %v205 = vadd.f32 0.0, %v204
    %206 = vdwg.mxu0
    %207 = vmatpush.msra.mxu0 0.0
    %208 = vmatpush.msra.mxu0 0.0
    %209 = vmatpush.msra.mxu0 0.0
    %210 = vmatpush.msra.mxu0 0.0
    %211 = vmatpush.msra.mxu0 0.0
    %212 = vmatpush.msra.mxu0 0.0
    %213 = vmatpush.msra.mxu0 0.0
    %214 = vmatpush.msra.mxu0 0.0
    %215 = vmatpush.msra.mxu0 0.0
    %216 = vmatpush.msra.mxu0 0.0
    %217 = vmatpush.msra.mxu0 0.0
    %218 = vmatpush.msra.mxu0 0.0
    %219 = vmatpush.msra.mxu0 0.0
    %220 = vmatpush.msra.mxu0 0.0
    %221 = vmatpush.msra.mxu0 %v131
    %222 = vmatpush.msra.mxu0 %v128
    %223 = vmatmul.f32.gmra.mxu0 %v165
    %v224 = vpop.f32.mrf.mxu0
    %v225 = vadd.f32 0.0, %v224
    %226 = vdwg.mxu0
    %227 = vmatpush.msra.mxu0 0.0
    %228 = vmatpush.msra.mxu0 0.0
    %229 = vmatpush.msra.mxu0 0.0
    %230 = vmatpush.msra.mxu0 0.0
    %231 = vmatpush.msra.mxu0 0.0
    %232 = vmatpush.msra.mxu0 0.0
    %233 = vmatpush.msra.mxu0 0.0
    %234 = vmatpush.msra.mxu0 0.0
    %235 = vmatpush.msra.mxu0 0.0
    %236 = vmatpush.msra.mxu0 0.0
    %237 = vmatpush.msra.mxu0 0.0
    %238 = vmatpush.msra.mxu0 0.0
    %239 = vmatpush.msra.mxu0 0.0
    %240 = vmatpush.msra.mxu0 0.0
    %241 = vmatpush.msra.mxu0 %v137
    %242 = vmatpush.msra.mxu0 %v134
    %243 = vmatmul.f32.gmra.mxu0 %v165
    %v244 = vpop.f32.mrf.mxu0
    %v245 = vadd.f32 0.0, %v244
    %246 = vdwg.mxu0
    %247 = vmatpush.msra.mxu0 0.0
    %248 = vmatpush.msra.mxu0 0.0
    %249 = vmatpush.msra.mxu0 0.0
    %250 = vmatpush.msra.mxu0 0.0
    %251 = vmatpush.msra.mxu0 0.0
    %252 = vmatpush.msra.mxu0 0.0
    %253 = vmatpush.msra.mxu0 0.0
    %254 = vmatpush.msra.mxu0 0.0
    %255 = vmatpush.msra.mxu0 0.0
    %256 = vmatpush.msra.mxu0 0.0
    %257 = vmatpush.msra.mxu0 0.0
    %258 = vmatpush.msra.mxu0 0.0
    %259 = vmatpush.msra.mxu0 0.0
    %260 = vmatpush.msra.mxu0 0.0
    %261 = vmatpush.msra.mxu0 %v143
    %262 = vmatpush.msra.mxu0 %v140
    %263 = vmatmul.f32.gmra.mxu0 %v165
    %v264 = vpop.f32.mrf.mxu0
    %v265 = vadd.f32 0.0, %v264
    %266 = vdwg.mxu0
    %267 = vmatpush.msra.mxu0 0.0
    %268 = vmatpush.msra.mxu0 0.0
    %269 = vmatpush.msra.mxu0 0.0
    %270 = vmatpush.msra.mxu0 0.0
    %271 = vmatpush.msra.mxu0 0.0
    %272 = vmatpush.msra.mxu0 0.0
    %273 = vmatpush.msra.mxu0 0.0
    %274 = vmatpush.msra.mxu0 0.0
    %275 = vmatpush.msra.mxu0 0.0
    %276 = vmatpush.msra.mxu0 0.0
    %277 = vmatpush.msra.mxu0 0.0
    %278 = vmatpush.msra.mxu0 0.0
    %279 = vmatpush.msra.mxu0 0.0
    %280 = vmatpush.msra.mxu0 0.0
    %281 = vmatpush.msra.mxu0 %v149
    %282 = vmatpush.msra.mxu0 %v146
    %283 = vmatmul.f32.gmra.mxu0 %v165
    %v284 = vpop.f32.mrf.mxu0
    %v285 = vadd.f32 0.0, %v284
    %286 = vdwg.mxu0
    %287 = vmatpush.msra.mxu0 0.0
    %288 = vmatpush.msra.mxu0 0.0
    %289 = vmatpush.msra.mxu0 0.0
    %290 = vmatpush.msra.mxu0 0.0
    %291 = vmatpush.msra.mxu0 0.0
    %292 = vmatpush.msra.mxu0 0.0
    %293 = vmatpush.msra.mxu0 0.0
    %294 = vmatpush.msra.mxu0 0.0
    %295 = vmatpush.msra.mxu0 0.0
    %296 = vmatpush.msra.mxu0 0.0
    %297 = vmatpush.msra.mxu0 0.0
    %298 = vmatpush.msra.mxu0 0.0
    %299 = vmatpush.msra.mxu0 0.0
    %300 = vmatpush.msra.mxu0 0.0
    %301 = vmatpush.msra.mxu0 %v155
    %302 = vmatpush.msra.mxu0 %v152
    %303 = vmatmul.f32.gmra.mxu0 %v165
    %v304 = vpop.f32.mrf.mxu0
    %v305 = vadd.f32 0.0, %v304
    %306 = vdwg.mxu0
    %307 = vmatpush.msra.mxu0 0.0
    %308 = vmatpush.msra.mxu0 0.0
    %309 = vmatpush.msra.mxu0 0.0
    %310 = vmatpush.msra.mxu0 0.0
    %311 = vmatpush.msra.mxu0 0.0
    %312 = vmatpush.msra.mxu0 0.0
    %313 = vmatpush.msra.mxu0 0.0
    %314 = vmatpush.msra.mxu0 0.0
    %315 = vmatpush.msra.mxu0 0.0
    %316 = vmatpush.msra.mxu0 0.0
    %317 = vmatpush.msra.mxu0 0.0
    %318 = vmatpush.msra.mxu0 0.0
    %319 = vmatpush.msra.mxu0 0.0
    %320 = vmatpush.msra.mxu0 0.0
    %321 = vmatpush.msra.mxu0 %v161
    %322 = vmatpush.msra.mxu0 %v158
    %323 = vmatmul.f32.gmra.mxu0 %v165
    %v324 = vpop.f32.mrf.mxu0
    %v325 = vadd.f32 0.0, %v324
    %326 = vdwg.mxu0
    %vm327 = vcmask 64512
    %328 = vst.msk [vmem:[#allocation5] sm:$0xff] %vm327, %v185
    %329 = vst.msk [vmem:[#allocation5 + $0x8] sm:$0xff] %vm327, %v205
    %330 = vst.msk [vmem:[#allocation5 + $0x10] sm:$0xff] %vm327, %v225
    %331 = vst.msk [vmem:[#allocation5 + $0x18] sm:$0xff] %vm327, %v245
    %332 = vst.msk [vmem:[#allocation5 + $0x20] sm:$0xff] %vm327, %v265
    %333 = vst.msk [vmem:[#allocation5 + $0x28] sm:$0xff] %vm327, %v285
    %334 = vst.msk [vmem:[#allocation5 + $0x30] sm:$0xff] %vm327, %v305
    %335 = vst.msk [vmem:[#allocation5 + $0x38] sm:$0xff] %vm327, %v325
    // Predicated region
    $region18: #{tpu_custom_call.1} parent=1 // pred_check
      _
    $region19: #{tpu_custom_call.1} parent=1 // pred_check_branch
      %337 = sbr.rel (0) target = $region21
    $region20: #{tpu_custom_call.1} parent=1 // pred_region
      %339 = vsyncadd [#allocation4], 0
      %s340 = sshll.u32 [#allocation5], 4
      %s341 = int_to_ptr.vmem [resolvable:$true] %s340
      %s342 = sshll.u32 %s3, 4
      %s343 = int_to_ptr.hbm [resolvable:$true] %s342
      %348 = dma.vmem_to_hbm [thread:$0]  %s341, 1024, %s343, [#allocation4], 128, 128, 8
    $region21: #{tpu_custom_call.1} parent=1 // pred_fallthru
      _
    // Predicated region
    $region22: #{tpu_custom_call.1} parent=1 // pred_check
      _
    $region23: #{tpu_custom_call.1} parent=1 // pred_check_branch
      %350 = sbr.rel (0) target = $region25
    $region24: #{tpu_custom_call.1} parent=1 // pred_region
      %352 = dma.done [#allocation4], 1024
    $region25: #{tpu_custom_call.1} parent=1 // pred_fallthru
      _
    %353 = vsyncpa [#allocation3], 1
    %354 = vsyncpa [#allocation4], 1

</llo_original>
